<compile_context>
chip_gen: v7x
topology: tpu7x:2x2x1
jax: 0.10.0
libtpu: 0.0.40
codegen_flags: <defaults>
</compile_context>

<pallas_src>
import math

import jax
import jax.numpy as jnp
from jax.experimental import pallas as pl
from jax.experimental.pallas import tpu as pltpu

_LANE = 128


def _affine_kernel(x_ref, scale_ref, shift_ref, o_ref):
    # x_ref:     (block_rows, Df) tile
    # scale_ref: (1, Df)  broadcast over rows
    # shift_ref: (1, Df)  broadcast over rows
    o_ref[...] = (x_ref[...] * scale_ref[...] + shift_ref[...]).astype(o_ref.dtype)


def _choose_block_rows(n_rows, n_cols, itemsize, target_tile_bytes):
    """Row-tile height: whole array if it fits the budget, otherwise the
    largest multiple of 8 whose (rows, n_cols) tile stays under budget."""
    max_rows = max(8, target_tile_bytes // max(1, n_cols * itemsize))
    if n_rows <= max_rows:
        return n_rows
    return max(8, (max_rows // 8) * 8)


def batchnorm_forward(x, log_gamma, beta, moving_mean, moving_variance,
                      epsilon=1e-5, *, block_rows=None,
                      target_tile_bytes=2 << 20):
    """Pallas TPU implementation of BatchNorm.forward (flow convention)."""
    N, D = x.shape

    # ---- Fold params (all (1, D), negligible cost) into one affine pair. ----
    f32 = jnp.float32
    scale = jnp.exp(-log_gamma.astype(f32)) * jnp.sqrt(
        moving_variance.astype(f32) + jnp.asarray(epsilon, f32))
    shift = moving_mean.astype(f32) - beta.astype(f32) * scale
    # bf16 inputs: keep the broadcast mul/add in bf16 (v6e/v7x VPU has bf16).
    param_dtype = x.dtype if x.dtype == jnp.bfloat16 else f32
    scale = scale.astype(param_dtype).reshape(1, D)
    shift = shift.astype(param_dtype).reshape(1, D)

    # ---- Lane-dense fold when D < 128. ----
    fold = 1
    if D < _LANE:
        k = math.lcm(D, _LANE) // D
        if N % k == 0:
            fold = k
    Nf, Df = N // fold, D * fold
    if fold > 1:
        x_slab = x.reshape(Nf, Df)
        scale = jnp.tile(scale, (1, fold))
        shift = jnp.tile(shift, (1, fold))
    else:
        x_slab = x

    # ---- Tile selection against the scoped-VMEM budget. ----
    itemsize = jnp.dtype(x.dtype).itemsize
    if block_rows is None:
        block_rows = _choose_block_rows(Nf, Df, itemsize, target_tile_bytes)
    block_rows = min(block_rows, Nf)
    assert block_rows == Nf or block_rows % 8 == 0, \
        "block_rows must be a multiple of 8 (or cover the whole batch)"

    tile_bytes = block_rows * Df * itemsize
    # x + out, each double-buffered (~4x tile) + params; add headroom, but cap
    # well under v7x's 64 MiB physical VMEM.
    vmem_limit = int(min(48 << 20, max(16 << 20, 6 * tile_bytes)))

    grid = (pl.cdiv(Nf, block_rows),)
    param_spec = pl.BlockSpec((1, Df), lambda i: (0, 0))

    out = pl.pallas_call(
        _affine_kernel,
        out_shape=jax.ShapeDtypeStruct((Nf, Df), x.dtype),
        grid_spec=pltpu.PrefetchScalarGridSpec(
            num_scalar_prefetch=0,
            grid=grid,
            in_specs=[
                pl.BlockSpec((block_rows, Df), lambda i: (i, 0)),  # x slab
                param_spec,                                        # scale
                param_spec,                                        # shift
            ],
            out_specs=pl.BlockSpec((block_rows, Df), lambda i: (i, 0)),
        ),
        compiler_params=pltpu.CompilerParams(
            dimension_semantics=("parallel",),
            vmem_limit_bytes=vmem_limit),
    )(x_slab, scale, shift)

    return out.reshape(N, D) if fold > 1 else out


def batchnorm_forward_ref(x, log_gamma, beta, moving_mean, moving_variance,
                          epsilon=1e-5):
    gamma = jnp.exp(log_gamma)
    return (x - beta) / gamma * jnp.sqrt(moving_variance + epsilon) + moving_mean


if __name__ == "__main__":
    epsilon = 1e-5
    key = jax.random.PRNGKey(0)

    def make_inputs(key, N, D):
        kx, kg, kb, km, kv = jax.random.split(key, 5)
        x = jax.random.normal(kx, (N, D), dtype=jnp.float32)
        log_gamma = 0.1 * jax.random.normal(kg, (1, D), dtype=jnp.float32)
        beta = 0.1 * jax.random.normal(kb, (1, D), dtype=jnp.float32)
        moving_mean = 0.1 * jax.random.normal(km, (1, D), dtype=jnp.float32)
        moving_variance = jnp.ones((1, D), dtype=jnp.float32) \
            + 0.05 * jax.random.uniform(kv, (1, D), dtype=jnp.float32)
        return x, log_gamma, beta, moving_mean, moving_variance

    # Case 1: module-like small shape (batch=8, input_dim=32) -> lane fold k=4.
    k1, k2, k3 = jax.random.split(key, 3)
    x, lg, b, mm, mv = make_inputs(k1, 8, 32)
    out = jax.block_until_ready(batchnorm_forward(x, lg, b, mm, mv, epsilon))
    ref = batchnorm_forward_ref(x, lg, b, mm, mv, epsilon)
    assert out.shape == x.shape and out.dtype == x.dtype
    assert jnp.allclose(out, ref, atol=1e-5, rtol=1e-5), \
        f"max abs err = {jnp.max(jnp.abs(out - ref))}"

    # Case 2: larger batch, exercises the folded + row-tiled path.
    x, lg, b, mm, mv = make_inputs(k2, 64, 32)
    out = jax.block_until_ready(batchnorm_forward(x, lg, b, mm, mv, epsilon))
    ref = batchnorm_forward_ref(x, lg, b, mm, mv, epsilon)
    assert jnp.allclose(out, ref, atol=1e-5, rtol=1e-5), \
        f"max abs err = {jnp.max(jnp.abs(out - ref))}"

    # Case 3: ragged batch (no clean fold / divisor) -> masked final tile path.
    x, lg, b, mm, mv = make_inputs(k3, 50, 160)
    out = jax.block_until_ready(batchnorm_forward(x, lg, b, mm, mv, epsilon,
                                                  block_rows=8))
    ref = batchnorm_forward_ref(x, lg, b, mm, mv, epsilon)
    assert jnp.allclose(out, ref, atol=1e-5, rtol=1e-5), \
        f"max abs err = {jnp.max(jnp.abs(out - ref))}"

    print("KERNEL_OK")
</pallas_src>

<mosaic_0001>
module attributes {stable_mosaic.version = 11 : i64} {
  func.func @_affine_kernel(%arg0: i32, %arg1: memref<2x128xf32, #tpu.memory_space<vmem>>, %arg2: memref<1x128xf32, #tpu.memory_space<vmem>>, %arg3: memref<1x128xf32, #tpu.memory_space<vmem>>, %arg4: memref<2x128xf32, #tpu.memory_space<vmem>>) attributes {dimension_semantics = [#tpu.dimension_semantics<parallel>], iteration_bounds = array<i64: 1>, scalar_prefetch = 0 : i64, scratch_operands = 0 : i64, tpu.core_type = #tpu.core_type<tc>, window_params = [{transform_indices = @transform_0, window_bounds = array<i64: 2, 128>}, {pipeline_mode = #tpu.pipeline_mode<synchronous>, transform_indices = @transform_1, window_bounds = array<i64: 1, 128>}, {pipeline_mode = #tpu.pipeline_mode<synchronous>, transform_indices = @transform_2, window_bounds = array<i64: 1, 128>}, {transform_indices = @transform_3, window_bounds = array<i64: 2, 128>}]} {
    %c0 = arith.constant 0 : index
    %c0_0 = arith.constant 0 : index
    %0 = vector.load %arg1[%c0, %c0_0] : memref<2x128xf32, #tpu.memory_space<vmem>>, vector<2x128xf32>
    %c0_1 = arith.constant 0 : index
    %c0_2 = arith.constant 0 : index
    %1 = vector.load %arg2[%c0_1, %c0_2] : memref<1x128xf32, #tpu.memory_space<vmem>>, vector<1x128xf32>
    %2 = vector.broadcast %1 : vector<1x128xf32> to vector<2x128xf32>
    %3 = arith.mulf %0, %2 : vector<2x128xf32>
    %c0_3 = arith.constant 0 : index
    %c0_4 = arith.constant 0 : index
    %4 = vector.load %arg3[%c0_3, %c0_4] : memref<1x128xf32, #tpu.memory_space<vmem>>, vector<1x128xf32>
    %5 = vector.broadcast %4 : vector<1x128xf32> to vector<2x128xf32>
    %6 = arith.addf %3, %5 : vector<2x128xf32>
    %c0_5 = arith.constant 0 : index
    %c0_6 = arith.constant 0 : index
    %7 = vector.load %arg4[%c0_5, %c0_6] : memref<2x128xf32, #tpu.memory_space<vmem>>, vector<2x128xf32>
    tpu.vector_store %arg4[%c0_5, %c0_6], %6 {strides = array<i32>} : memref<2x128xf32, #tpu.memory_space<vmem>>, vector<2x128xf32>,
    return
  }
  func.func @transform_0(%arg0: i32) -> (i32, i32) {
    %c0_i32 = arith.constant 0 : i32
    %c0_i32_0 = arith.constant 0 : i32
    return %arg0, %c0_i32 : i32, i32
  }
  func.func @transform_1(%arg0: i32) -> (i32, i32) {
    %c0_i32 = arith.constant 0 : i32
    %c0_i32_0 = arith.constant 0 : i32
    %c0_i32_1 = arith.constant 0 : i32
    return %c0_i32, %c0_i32_0 : i32, i32
  }
  func.func @transform_2(%arg0: i32) -> (i32, i32) {
    %c0_i32 = arith.constant 0 : i32
    %c0_i32_0 = arith.constant 0 : i32
    %c0_i32_1 = arith.constant 0 : i32
    return %c0_i32, %c0_i32_0 : i32, i32
  }
  func.func @transform_3(%arg0: i32) -> (i32, i32) {
    %c0_i32 = arith.constant 0 : i32
    %c0_i32_0 = arith.constant 0 : i32
    return %arg0, %c0_i32 : i32, i32
  }
}

</mosaic_0001>

<llo_original>
// kernel: tpu_custom_call.1
$region0: #{tpu_custom_call.1}
  #allocation0 [shape = 'u32[]', space=smem, size = 0x4, offset = 0x4, fixed_abs, tag = 'smem constant byte address 0x4 - core index']
  #allocation1 [shape = 'u32[144,128]{1,0:T(1,128)}', space=vmem, size = 0x12000, scoped, tag = 'internal scratch']
  %s0 = inlined_call_operand.hbm [shape: f32[2,128], index: 0, kind: input, shape index: {}]
  %s1 = inlined_call_operand.vmem [shape: f32[1,128], index: 1, kind: input, shape index: {}]
  %s2 = inlined_call_operand.vmem [shape: f32[1,128], index: 2, kind: input, shape index: {}]
  %s3 = inlined_call_operand.hbm [shape: f32[2,128], index: 3, kind: output, shape index: {}]
  %s4 = sld [smem:[#allocation0]]
  $region26: #{tpu_custom_call.1} parent=0
    _
  %s6 = ssub.s32 1, %s4
  %s7 = scalar_select 0, %s6, %s4
  $region1: #{tpu_custom_call.1} parent=0
    #allocation2 [shape = 'u8[1024]{0}', space=vmem, size = 0x400, scoped, tag = 'input window, operand 0, single buffered']
    #allocation3 [shape = 's32[1]{0}', space=sflag, size = 0x4, scoped, tag = 'scoped memory for tpu_custom_call.1']
    #allocation4 [shape = 's32[1]{0}', space=sflag, size = 0x4, scoped, tag = 'scoped memory for tpu_custom_call.1']
    #allocation5 [shape = 'u8[1024]{0}', space=vmem, size = 0x400, scoped, tag = 'output window, operand 0, single buffered']
    %8 = vsyncpa [#allocation3], 0
    %9 = vsyncpa [#allocation4], 0
    // Predicated region
    $region2: #{tpu_custom_call.1} parent=1 // pred_check
      _
    $region3: #{tpu_custom_call.1} parent=1 // pred_check_branch
      %11 = sbr.rel (0) target = $region5
    $region4: #{tpu_custom_call.1} parent=1 // pred_region
      %s13 = ssub.s32 32, 32
      %14 = vsyncadd [#allocation3], %s13
      %s16 = sshll.u32 [#allocation2], 4
      %s17 = int_to_ptr.vmem [resolvable:$true] %s16
      %19 = dma.hbm_to_vmem [thread:$0]  %s0, 32, %s17, [#allocation3]
    $region5: #{tpu_custom_call.1} parent=1 // pred_fallthru
      _
    // Predicated region
    $region6: #{tpu_custom_call.1} parent=1 // pred_check
      _
    $region7: #{tpu_custom_call.1} parent=1 // pred_check_branch
      %21 = sbr.rel (0) target = $region9
    $region8: #{tpu_custom_call.1} parent=1 // pred_region
      _
    $region9: #{tpu_custom_call.1} parent=1 // pred_fallthru
      _
    // Predicated region
    $region10: #{tpu_custom_call.1} parent=1 // pred_check
      _
    $region11: #{tpu_custom_call.1} parent=1 // pred_check_branch
      %23 = sbr.rel (0) target = $region13
    $region12: #{tpu_custom_call.1} parent=1 // pred_region
      _
    $region13: #{tpu_custom_call.1} parent=1 // pred_fallthru
      _
    // Predicated region
    $region14: #{tpu_custom_call.1} parent=1 // pred_check
      _
    $region15: #{tpu_custom_call.1} parent=1 // pred_check_branch
      %25 = sbr.rel (0) target = $region17
    $region16: #{tpu_custom_call.1} parent=1 // pred_region
      %26 = dma.done [#allocation3], 32
    $region17: #{tpu_custom_call.1} parent=1 // pred_fallthru
      _
    %v27 = vld [vmem:[#allocation2] sm:$0x3]
    %v28 = vld [vmem:[%s1] sm:$0x1]
    %v30 = vlaneseq
    %v31 = vshrl.u32 %v30, 7
    %v32 = vsub.s32 0, %v31
    %v33 = vrot.slane %v28, %v32
    %v35 = vmul.f32 %v27, %v33
    %v36 = vld [vmem:[%s2] sm:$0x1]
    %v38 = vlaneseq
    %v39 = vshrl.u32 %v38, 7
    %v40 = vsub.s32 0, %v39
    %v41 = vrot.slane %v36, %v40
    %v43 = vadd.f32 %v35, %v41
    %44 = vst [vmem:[#allocation5] sm:$0x3] %v43
    // Predicated region
    $region18: #{tpu_custom_call.1} parent=1 // pred_check
      _
    $region19: #{tpu_custom_call.1} parent=1 // pred_check_branch
      %46 = sbr.rel (0) target = $region21
    $region20: #{tpu_custom_call.1} parent=1 // pred_region
      %s48 = ssub.s32 32, 32
      %49 = vsyncadd [#allocation4], %s48
      %s51 = sshll.u32 [#allocation5], 4
      %s52 = int_to_ptr.vmem [resolvable:$true] %s51
      %54 = dma.vmem_to_hbm [thread:$0]  %s52, 32, %s3, [#allocation4]
    $region21: #{tpu_custom_call.1} parent=1 // pred_fallthru
      _
    // Predicated region
    $region22: #{tpu_custom_call.1} parent=1 // pred_check
      _
    $region23: #{tpu_custom_call.1} parent=1 // pred_check_branch
      %56 = sbr.rel (0) target = $region25
    $region24: #{tpu_custom_call.1} parent=1 // pred_region
      %57 = dma.done [#allocation4], 32
    $region25: #{tpu_custom_call.1} parent=1 // pred_fallthru
      _
    %58 = vsyncpa [#allocation3], 1
    %59 = vsyncpa [#allocation4], 1

</llo_original>
